<compile_context>
chip_gen: v6e
topology: v6e:2x2x1
jax: 0.10.0
libtpu: 0.0.40
codegen_flags: <defaults>
</compile_context>

<pallas_src>
import jax
import jax.numpy as jnp
from jax.experimental import pallas as pl
from jax.experimental.pallas import tpu as pltpu


def _round_up(x, m):
    return ((x + m - 1) // m) * m


def _choose_tiling(n_rows):
    """Pick (row_tile, grid_steps, padded_rows) per TPU generation.

    v5e & older : modest tile (<=256) -- f32 MXU passes are the per-row
                  bottleneck and default scoped VMEM is only 16 MiB.
    v6e         : large tile (<=1024) so small problems run in 1-2 grid steps
                  (per-step pipeline overhead ~0.35us dominates at these sizes).
    v7x/unknown : tile <=512 and an EVEN number of >=2 grid steps so the single
                  'parallel' axis actually splits across both TensorCores.
    """
    try:
        kind = jax.devices()[0].device_kind.lower()
    except Exception:
        kind = ""
    if any(v in kind for v in ("v2", "v3", "v4", "v5")):
        tm_max, min_steps = 256, 1
    elif "v6" in kind:
        tm_max, min_steps = 1024, 1
    else:
        tm_max, min_steps = 512, 2

    n8 = max(_round_up(n_rows, 8), 8)
    steps = max(min_steps, -(-n8 // tm_max))
    if min_steps == 2 and steps % 2:
        steps += 1
    tm = max(8, _round_up(-(-n8 // steps), 8))
    return tm, steps, tm * steps


def _pair_gather_kernel(idx_ref, dpos_tab_ref, dmask_tab_ref,
                        dpos_out_ref, dmask_out_ref):
    """Two pair-fused embedding gathers as one-hot @ table MXU matmuls.

    idx_ref:       (TM, 4) int32 -- [dpos1, dpos2+Vp, dmask1, dmask2+Vp]
    dpos_tab_ref:  (2*Vp, W) f32 -- rows [0:V]  x cols [0:D]  = dpos1 table,
                                    rows [Vp:+V] x cols [D:2D] = dpos2 table
    dmask_tab_ref: (2*Vp, W) f32 -- same layout for dmask1 / dmask2
    dpos_out_ref:  (TM, W)       -- rows already [dpos1_emb | dpos2_emb | pad]
    dmask_out_ref: (TM, W) f32   -- rows already [dmask1_emb| dmask2_emb| pad]
    """
    idx = idx_ref[...]                                    # load the tile once
    k = dpos_tab_ref.shape[0]                             # 2 * Vp
    # (1, K) lane iota; the compares broadcast it over the TM sublanes.
    col = jax.lax.broadcasted_iota(jnp.int32, (1, k), 1)

    # Each pair: one compare per slot + a single OR (slots live in disjoint
    # Vp-bands of K, so the fused one-hot has exactly two ones per row).
    hit_p = (col == idx[:, 0:1]) | (col == idx[:, 1:2])
    hit_m = (col == idx[:, 2:3]) | (col == idx[:, 3:4])

    # One MXU matmul per pair; rows come out already in concatenated
    # [slot0 | slot1] channel order and are stored lane-dense (W % 128 == 0).
    # Default f32 dot lowering (multi-pass) keeps each gathered value exact
    # enough for the 1e-5 check below.
    dpos_out_ref[...] = jnp.dot(
        hit_p.astype(dpos_tab_ref.dtype), dpos_tab_ref[...],
        preferred_element_type=jnp.float32).astype(dpos_out_ref.dtype)
    dmask_out_ref[...] = jnp.dot(
        hit_m.astype(dmask_tab_ref.dtype), dmask_tab_ref[...],
        preferred_element_type=jnp.float32).astype(dmask_out_ref.dtype)


def init_demb_tables(dpos1_tab, dpos2_tab, dmask1_tab, dmask2_tab):
    """Build the two pair-fused gather tables ONCE (module init, not per call).

    Pair table layout (2*Vp, W): slot 0 in rows [0:V], cols [0:D]; slot 1 in
    rows [Vp:Vp+V], cols [D:2D].  W = round_up(2*D, 128) keeps every kernel
    store lane-dense and makes the [emb0 | emb1] concatenation a free byproduct.
    """
    V, D = dpos1_tab.shape
    Vp = _round_up(V, 64)            # 2*Vp is a multiple of 128
    W = _round_up(2 * D, 128)

    def pair(t0, t1):
        tab = jnp.zeros((2 * Vp, W), dtype=jnp.float32)
        tab = tab.at[:V, :D].set(t0.astype(jnp.float32))
        tab = tab.at[Vp:Vp + V, D:2 * D].set(t1.astype(jnp.float32))
        return tab

    return {
        "dpos_tab": pair(dpos1_tab, dpos2_tab),
        "dmask_tab": pair(dmask1_tab, dmask2_tab),
        "V": V, "D": D, "Vp": Vp, "W": W,
    }


def len2mask(bert):
    # Matches the module's len2mask (sum over hidden == 0 -> 0 else 1).  The
    # original module computes it but never returns it (dead work); kept here
    # for fidelity only.  The float-sum==0 criterion is inherited and fragile.
    s = jnp.sum(bert, axis=-1)
    return jnp.where(s == 0, jnp.zeros_like(s), jnp.ones_like(s)).astype(jnp.float32)


def embedding_forward(params, dpos1, dpos2, dmask1, dmask2, bert, *, row_tile=None):
    """Returns (bert_cat, demb) exactly as the PyTorch module computes them
    (the third return value, all_input_mask, comes from tokenization and is
    passed through by the caller)."""
    B, L = dpos1.shape
    V, D, Vp, W = params["V"], params["D"], params["Vp"], params["W"]

    N = B * L
    if row_tile is None:
        TM, steps, N_pad = _choose_tiling(N)
    else:
        TM = row_tile
        steps = -(-max(N, 1) // TM)
        N_pad = TM * steps

    # Stacked indices, clamped (an out-of-range index would otherwise silently
    # alias into the other slot's Vp band), then the second slot of each pair
    # shifted by Vp.  Padding rows select zero table rows and are sliced off.
    idx = jnp.stack(
        [dpos1.reshape(-1), dpos2.reshape(-1),
         dmask1.reshape(-1), dmask2.reshape(-1)], axis=1).astype(jnp.int32)
    idx = jnp.clip(idx, 0, V - 1)
    idx = jnp.pad(idx, ((0, N_pad - N), (0, 0)))
    idx = idx + jnp.array([0, Vp, 0, Vp], dtype=jnp.int32)[None, :]

    # NOTE: the pair tables are grid-invariant and tiny here; double-buffering
    # them is negligible.  For a much larger vocab, add
    # pipeline_mode=pl.Buffered(1) on the table specs and set vmem_limit_bytes
    # explicitly (v7x: 32 MiB scoped / 64 MiB physical).
    out_p, out_m = pl.pallas_call(
        _pair_gather_kernel,
        out_shape=(jax.ShapeDtypeStruct((N_pad, W), bert.dtype),    # dpos pair
                   jax.ShapeDtypeStruct((N_pad, W), jnp.float32)),  # dmask pair
        grid_spec=pltpu.PrefetchScalarGridSpec(
            num_scalar_prefetch=0,
            grid=(steps,),
            in_specs=[
                pl.BlockSpec((TM, 4), lambda i: (i, 0)),
                pl.BlockSpec((2 * Vp, W), lambda i: (0, 0)),
                pl.BlockSpec((2 * Vp, W), lambda i: (0, 0)),
            ],
            out_specs=[
                pl.BlockSpec((TM, W), lambda i: (i, 0)),
                pl.BlockSpec((TM, W), lambda i: (i, 0)),
            ],
        ),
        compiler_params=pltpu.CompilerParams(
            dimension_semantics=("parallel",)),
    )(idx, params["dpos_tab"], params["dmask_tab"])

    slab_p = out_p[:N].reshape(B, L, W)
    slab_m = out_m[:N].reshape(B, L, W)

    # bert stays out of the kernel and in its native dtype; the dpos pair output
    # is already [dpos1_emb | dpos2_emb], so this is a single 2-way concat.
    bert_cat = jnp.concatenate([bert, slab_p[..., :2 * D]], axis=-1)
    # demb = cat([dmask1_emb, dmask2_emb], -1) is just a slice of output #2.
    demb = slab_m[..., :2 * D]
    return bert_cat, demb


if __name__ == "__main__":
    key = jax.random.PRNGKey(0)

    # Small shapes consistent with the module: max_length=L, dpos/dmask dim=50,
    # BERT hidden kept small (multiple of 128, like the real 768).
    B, L, H, D = 2, 16, 128, 50
    V = 2 * L                        # nn.Embedding(2 * max_length, 50)

    k_t1, k_t2, k_t3, k_t4, k_bert, k_idx = jax.random.split(key, 6)

    def make_table(k):
        t = 0.02 * jax.random.normal(k, (V, D), dtype=jnp.float32)
        return t.at[0].set(0.0)      # padding_idx=0 -> zero row

    dpos1_tab = make_table(k_t1)
    dpos2_tab = make_table(k_t2)
    dmask1_tab = make_table(k_t3)
    dmask2_tab = make_table(k_t4)

    # Built once ("module init"), reused across forwards.
    params = init_demb_tables(dpos1_tab, dpos2_tab, dmask1_tab, dmask2_tab)

    # Synthetic BERT hidden states (see TODO at top); zero one position so the
    # len2mask path is exercised.
    bert = jax.random.normal(k_bert, (B, L, H), dtype=jnp.float32)
    bert = bert.at[0, L - 1, :].set(0.0)
    all_input_mask = jnp.ones((B, L), dtype=jnp.int32)

    ki1, ki2, ki3, ki4 = jax.random.split(k_idx, 4)
    dpos1 = jax.random.randint(ki1, (B, L), 0, V, dtype=jnp.int32)
    dpos2 = jax.random.randint(ki2, (B, L), 0, V, dtype=jnp.int32)
    dmask1 = jax.random.randint(ki3, (B, L), 0, V, dtype=jnp.int32)
    dmask2 = jax.random.randint(ki4, (B, L), 0, V, dtype=jnp.int32)

    bert_out, demb = embedding_forward(params, dpos1, dpos2, dmask1, dmask2, bert)
    mask = len2mask(bert)            # computed (like the module) but not returned
    jax.block_until_ready((bert_out, demb, mask))

    # Module's return value: (bert, demb, all_input_mask)
    outputs = (bert_out, demb, all_input_mask)

    # Plain-JAX reference check.
    ref_bert = jnp.concatenate([bert, dpos1_tab[dpos1], dpos2_tab[dpos2]], axis=2)
    ref_demb = jnp.concatenate([dmask1_tab[dmask1], dmask2_tab[dmask2]], axis=2)
    ref_mask = (jnp.sum(bert, axis=-1) != 0.0).astype(jnp.float32)

    assert bert_out.shape == (B, L, H + 2 * D)
    assert demb.shape == (B, L, 2 * D)
    assert bert_out.dtype == bert.dtype
    assert jnp.allclose(bert_out, ref_bert, atol=1e-5, rtol=1e-5)
    assert jnp.allclose(demb, ref_demb, atol=1e-5, rtol=1e-5)
    assert jnp.allclose(mask, ref_mask)

    print("KERNEL_OK")
</pallas_src>

<mosaic_0001>
module attributes {stable_mosaic.version = 11 : i64} {
  func.func @_pair_gather_kernel(%arg0: i32, %arg1: memref<16x4xi32, #tpu.memory_space<vmem>>, %arg2: memref<128x128xf32, #tpu.memory_space<vmem>>, %arg3: memref<128x128xf32, #tpu.memory_space<vmem>>, %arg4: memref<16x128xf32, #tpu.memory_space<vmem>>, %arg5: memref<16x128xf32, #tpu.memory_space<vmem>>) attributes {dimension_semantics = [#tpu.dimension_semantics<parallel>], iteration_bounds = array<i64: 2>, scalar_prefetch = 0 : i64, scratch_operands = 0 : i64, tpu.core_type = #tpu.core_type<tc>, window_params = [{transform_indices = @transform_0, window_bounds = array<i64: 16, 4>}, {pipeline_mode = #tpu.pipeline_mode<synchronous>, transform_indices = @transform_1, window_bounds = array<i64: 128, 128>}, {pipeline_mode = #tpu.pipeline_mode<synchronous>, transform_indices = @transform_2, window_bounds = array<i64: 128, 128>}, {transform_indices = @transform_3, window_bounds = array<i64: 16, 128>}, {transform_indices = @transform_4, window_bounds = array<i64: 16, 128>}]} {
    %c0 = arith.constant 0 : index
    %c0_0 = arith.constant 0 : index
    %0 = vector.load %arg1[%c0, %c0_0] : memref<16x4xi32, #tpu.memory_space<vmem>>, vector<16x4xi32>
    %1 = tpu.iota {dimensions = array<i32: 1>} : vector<1x128xi32>
    %2 = vector.extract_strided_slice %0 {offsets = [0, 0], sizes = [16, 1], strides = [1, 1]} : vector<16x4xi32> to vector<16x1xi32>
    %3 = vector.broadcast %1 : vector<1x128xi32> to vector<16x128xi32>
    %4 = vector.broadcast %2 : vector<16x1xi32> to vector<16x128xi32>
    %5 = arith.cmpi eq, %3, %4 : vector<16x128xi32>
    %6 = vector.extract_strided_slice %0 {offsets = [0, 1], sizes = [16, 1], strides = [1, 1]} : vector<16x4xi32> to vector<16x1xi32>
    %7 = vector.broadcast %1 : vector<1x128xi32> to vector<16x128xi32>
    %8 = vector.broadcast %6 : vector<16x1xi32> to vector<16x128xi32>
    %9 = arith.cmpi eq, %7, %8 : vector<16x128xi32>
    %10 = arith.ori %5, %9 : vector<16x128xi1>
    %11 = vector.extract_strided_slice %0 {offsets = [0, 2], sizes = [16, 1], strides = [1, 1]} : vector<16x4xi32> to vector<16x1xi32>
    %12 = vector.broadcast %1 : vector<1x128xi32> to vector<16x128xi32>
    %13 = vector.broadcast %11 : vector<16x1xi32> to vector<16x128xi32>
    %14 = arith.cmpi eq, %12, %13 : vector<16x128xi32>
    %15 = vector.extract_strided_slice %0 {offsets = [0, 3], sizes = [16, 1], strides = [1, 1]} : vector<16x4xi32> to vector<16x1xi32>
    %16 = vector.broadcast %1 : vector<1x128xi32> to vector<16x128xi32>
    %17 = vector.broadcast %15 : vector<16x1xi32> to vector<16x128xi32>
    %18 = arith.cmpi eq, %16, %17 : vector<16x128xi32>
    %19 = arith.ori %14, %18 : vector<16x128xi1>
    %20 = arith.extui %10 : vector<16x128xi1> to vector<16x128xi32>
    %21 = arith.sitofp %20 : vector<16x128xi32> to vector<16x128xf32>
    %c0_1 = arith.constant 0 : index
    %c0_2 = arith.constant 0 : index
    %22 = vector.load %arg2[%c0_1, %c0_2] : memref<128x128xf32, #tpu.memory_space<vmem>>, vector<128x128xf32>
    %cst = arith.constant dense<0.000000e+00> : vector<16x128xf32>
    %23 = tpu.matmul %21, %22, %cst {dimension_numbers = #tpu.dot_dimension_numbers<[1], [0], [0], [1], [0, 0, 1, 1], [], []>} : vector<16x128xf32>, vector<128x128xf32>, vector<16x128xf32> -> vector<16x128xf32>
    %c0_3 = arith.constant 0 : index
    %c0_4 = arith.constant 0 : index
    %24 = vector.load %arg4[%c0_3, %c0_4] : memref<16x128xf32, #tpu.memory_space<vmem>>, vector<16x128xf32>
    tpu.vector_store %arg4[%c0_3, %c0_4], %23 {strides = array<i32>} : memref<16x128xf32, #tpu.memory_space<vmem>>, vector<16x128xf32>,
    %25 = arith.extui %19 : vector<16x128xi1> to vector<16x128xi32>
    %26 = arith.sitofp %25 : vector<16x128xi32> to vector<16x128xf32>
    %c0_5 = arith.constant 0 : index
    %c0_6 = arith.constant 0 : index
    %27 = vector.load %arg3[%c0_5, %c0_6] : memref<128x128xf32, #tpu.memory_space<vmem>>, vector<128x128xf32>
    %cst_7 = arith.constant dense<0.000000e+00> : vector<16x128xf32>
    %28 = tpu.matmul %26, %27, %cst_7 {dimension_numbers = #tpu.dot_dimension_numbers<[1], [0], [0], [1], [0, 0, 1, 1], [], []>} : vector<16x128xf32>, vector<128x128xf32>, vector<16x128xf32> -> vector<16x128xf32>
    %c0_8 = arith.constant 0 : index
    %c0_9 = arith.constant 0 : index
    %29 = vector.load %arg5[%c0_8, %c0_9] : memref<16x128xf32, #tpu.memory_space<vmem>>, vector<16x128xf32>
    tpu.vector_store %arg5[%c0_8, %c0_9], %28 {strides = array<i32>} : memref<16x128xf32, #tpu.memory_space<vmem>>, vector<16x128xf32>,
    return
  }
  func.func @transform_0(%arg0: i32) -> (i32, i32) {
    %c0_i32 = arith.constant 0 : i32
    %c0_i32_0 = arith.constant 0 : i32
    return %arg0, %c0_i32 : i32, i32
  }
  func.func @transform_1(%arg0: i32) -> (i32, i32) {
    %c0_i32 = arith.constant 0 : i32
    %c0_i32_0 = arith.constant 0 : i32
    %c0_i32_1 = arith.constant 0 : i32
    return %c0_i32, %c0_i32_0 : i32, i32
  }
  func.func @transform_2(%arg0: i32) -> (i32, i32) {
    %c0_i32 = arith.constant 0 : i32
    %c0_i32_0 = arith.constant 0 : i32
    %c0_i32_1 = arith.constant 0 : i32
    return %c0_i32, %c0_i32_0 : i32, i32
  }
  func.func @transform_3(%arg0: i32) -> (i32, i32) {
    %c0_i32 = arith.constant 0 : i32
    %c0_i32_0 = arith.constant 0 : i32
    return %arg0, %c0_i32 : i32, i32
  }
  func.func @transform_4(%arg0: i32) -> (i32, i32) {
    %c0_i32 = arith.constant 0 : i32
    %c0_i32_0 = arith.constant 0 : i32
    return %arg0, %c0_i32 : i32, i32
  }
}

</mosaic_0001>

<llo_original>
// kernel: tpu_custom_call.1
$region0: #{tpu_custom_call.1}
  #allocation0 [shape = 'u32[]', space=smem, size = 0x4, offset = 0x4, fixed_abs, tag = 'smem constant byte address 0x4 - core index']
  #allocation1 [shape = 'u32[144,128]{1,0:T(1,128)}', space=vmem, size = 0x12000, scoped, tag = 'internal scratch']
  %s0 = inlined_call_operand.vmem [shape: s32[32,4], index: 0, kind: input, shape index: {}]
  %s1 = inlined_call_operand.hbm [shape: f32[128,128], index: 1, kind: input, shape index: {}]
  %s2 = inlined_call_operand.hbm [shape: f32[128,128], index: 2, kind: input, shape index: {}]
  %s3 = inlined_call_operand.hbm [shape: f32[32,128], index: 3, kind: output, shape index: {0}]
  %s4 = inlined_call_operand.hbm [shape: f32[32,128], index: 4, kind: output, shape index: {1}]
  %5 = xla_tuple %s3, %s4
  %s6 = sld [smem:[#allocation0]]
  $region61: #{tpu_custom_call.1} parent=0
    _
  %s8 = ssub.s32 1, %s6
  %s9 = scalar_select 0, %s8, %s6
  $region1: #{tpu_custom_call.1} parent=0
    #allocation2 [shape = 'u8[65536]{0}', space=vmem, size = 0x10000, scoped, tag = 'input window, operand 1, single buffered']
    #allocation3 [shape = 's32[2]{0}', space=sflag, size = 0x8, scoped, tag = 'scoped memory for tpu_custom_call.1']
    #allocation4 [shape = 's32[2]{0}', space=sflag, size = 0x8, scoped, tag = 'scoped memory for tpu_custom_call.1']
    #allocation5 [shape = 'u8[65536]{0}', space=vmem, size = 0x10000, scoped, tag = 'input window, operand 2, single buffered']
    #allocation6 [shape = 's32[1]{0}', space=sflag, size = 0x4, scoped, tag = 'scoped memory for tpu_custom_call.1']
    #allocation7 [shape = 'u8[16384]{0}', space=vmem, size = 0x4000, scoped, tag = 'output window, operand 0']
    #allocation8 [shape = 'u8[16384]{0}', space=vmem, size = 0x4000, scoped, tag = 'output window, operand 1']
    #allocation9 [shape = 's32[2]{0}', space=sflag, size = 0x8, scoped, tag = 'scoped memory for tpu_custom_call.1']
    %10 = vsyncpa [#allocation3], 0
    %11 = vsyncpa [#allocation6], 0
    %12 = vsyncpa [#allocation4], 0
    %s13 = scalar_lea.sflag [#allocation4], 1
    %14 = vsyncpa %s13, 0
    %15 = vsyncpa [#allocation9], 0
    %s16 = scalar_lea.sflag [#allocation9], 1
    %17 = vsyncpa %s16, 0
    loop: start=0, step=1, limit=4
    $region2: #{tpu_custom_call.1} parent=1 // loop_pre_header
      _
    $region3: #{tpu_custom_call.1} parent=1 // loop_header
      %s19 = sphi 0, %s23
      %p20 = scmp.ge.s32.totalorder %s19, 4
      %s29 = sphi 0, %s31
      %s32 = sphi 0, %s29
      %s33 = sphi 0, %s32
      %s49 = sphi 0, %s33
      %s53 = sphi 0, %s53
      %s55 = sphi 0, %s53
      %s56 = sphi 0, %s55
      %s70 = sphi 0, %s56
      %s74 = sphi 0, %s74
      %s76 = sphi 0, %s74
      %s77 = sphi 0, %s76
      %s91 = sphi 0, %s77
      %s97 = sphi 0, %s99
      %s100 = sphi 0, %s97
      %s101 = sphi 0, %s100
      %s117 = sphi 0, %s101
      %s123 = sphi 0, %s125
      %s126 = sphi 0, %s123
      %s127 = sphi 0, %s126
      %s143 = sphi 0, %s127
    $region4: #{tpu_custom_call.1} parent=1 // loop_header_branch
      %22 = sbr.rel (%p20) target = $region8
    $region5: #{tpu_custom_call.1} parent=1 // loop_body
      %s24 = ssub.s32 %s19, 1
      %s25 = ssub.s32 %s19, 2
      %s26 = sadd.s32 %s19, 1
      %s27 = ssub.s32 %s19, %s26
      %p28 = scmp.eq.s32.totalorder %s27, 0
      %s30 = sadd.s32 %s29, 1
      %s31 = scalar_select %p28, %s29, %s30
      %p34 = pneg %p28
      %p35 = scmp.eq.s32.totalorder %s19, 1
      %p36 = por %p34, %p35
      %p37 = scmp.ne.s32.totalorder %s29, %s32
      %p38 = scmp.eq.s32.totalorder %s19, 0
      %p39 = por %p37, %p38
      %p40 = scmp.ne.s32.totalorder %s29, %s32
      %p41 = scmp.eq.s32.totalorder %s24, 1
      %p42 = por %p40, %p41
      %p43 = scmp.ne.s32.totalorder %s32, %s33
      %p44 = scmp.eq.s32.totalorder %s24, 0
      %p45 = por %p43, %p44
      %p46 = scmp.ne.s32.totalorder %s32, %s33
      %p47 = scmp.eq.s32.totalorder %s25, 1
      %p48 = por %p46, %p47
      %p50 = scmp.ne.s32.totalorder %s33, %s49
      %p51 = scmp.eq.s32.totalorder %s25, 0
      %p52 = por %p50, %p51
      %s54 = sadd.s32 %s53, 1
      %p57 = scmp.eq.s32.totalorder %s19, 1
      %p58 = scmp.ne.s32.totalorder %s53, %s55
      %p59 = scmp.eq.s32.totalorder %s19, 0
      %p60 = por %p58, %p59
      %p61 = scmp.ne.s32.totalorder %s53, %s55
      %p62 = scmp.eq.s32.totalorder %s24, 1
      %p63 = por %p61, %p62
      %p64 = scmp.ne.s32.totalorder %s55, %s56
      %p65 = scmp.eq.s32.totalorder %s24, 0
      %p66 = por %p64, %p65
      %p67 = scmp.ne.s32.totalorder %s55, %s56
      %p68 = scmp.eq.s32.totalorder %s25, 1
      %p69 = por %p67, %p68
      %p71 = scmp.ne.s32.totalorder %s56, %s70
      %p72 = scmp.eq.s32.totalorder %s25, 0
      %p73 = por %p71, %p72
      %s75 = sadd.s32 %s74, 1
      %p78 = scmp.eq.s32.totalorder %s19, 1
      %p79 = scmp.ne.s32.totalorder %s74, %s76
      %p80 = scmp.eq.s32.totalorder %s19, 0
      %p81 = por %p79, %p80
      %p82 = scmp.ne.s32.totalorder %s74, %s76
      %p83 = scmp.eq.s32.totalorder %s24, 1
      %p84 = por %p82, %p83
      %p85 = scmp.ne.s32.totalorder %s76, %s77
      %p86 = scmp.eq.s32.totalorder %s24, 0
      %p87 = por %p85, %p86
      %p88 = scmp.ne.s32.totalorder %s76, %s77
      %p89 = scmp.eq.s32.totalorder %s25, 1
      %p90 = por %p88, %p89
      %p92 = scmp.ne.s32.totalorder %s77, %s91
      %p93 = scmp.eq.s32.totalorder %s25, 0
      %p94 = por %p92, %p93
      %s95 = ssub.s32 %s19, %s26
      %p96 = scmp.eq.s32.totalorder %s95, 0
      %s98 = sadd.s32 %s97, 1
      %s99 = scalar_select %p96, %s97, %s98
      %p102 = pneg %p96
      %p103 = scmp.eq.s32.totalorder %s19, 1
      %p104 = por %p102, %p103
      %p105 = scmp.ne.s32.totalorder %s97, %s100
      %p106 = scmp.eq.s32.totalorder %s19, 0
      %p107 = por %p105, %p106
      %p108 = scmp.ne.s32.totalorder %s97, %s100
      %p109 = scmp.eq.s32.totalorder %s24, 1
      %p110 = por %p108, %p109
      %p111 = scmp.ne.s32.totalorder %s100, %s101
      %p112 = scmp.eq.s32.totalorder %s24, 0
      %p113 = por %p111, %p112
      %p114 = scmp.ne.s32.totalorder %s100, %s101
      %p115 = scmp.eq.s32.totalorder %s25, 1
      %p116 = por %p114, %p115
      %p118 = scmp.ne.s32.totalorder %s101, %s117
      %p119 = scmp.eq.s32.totalorder %s25, 0
      %p120 = por %p118, %p119
      %s121 = ssub.s32 %s19, %s26
      %p122 = scmp.eq.s32.totalorder %s121, 0
      %s124 = sadd.s32 %s123, 1
      %s125 = scalar_select %p122, %s123, %s124
      %p128 = pneg %p122
      %p129 = scmp.eq.s32.totalorder %s19, 1
      %p130 = por %p128, %p129
      %p131 = scmp.ne.s32.totalorder %s123, %s126
      %p132 = scmp.eq.s32.totalorder %s19, 0
      %p133 = por %p131, %p132
      %p134 = scmp.ne.s32.totalorder %s123, %s126
      %p135 = scmp.eq.s32.totalorder %s24, 1
      %p136 = por %p134, %p135
      %p137 = scmp.ne.s32.totalorder %s126, %s127
      %p138 = scmp.eq.s32.totalorder %s24, 0
      %p139 = por %p137, %p138
      %p140 = scmp.ne.s32.totalorder %s126, %s127
      %p141 = scmp.eq.s32.totalorder %s25, 1
      %p142 = por %p140, %p141
      %p144 = scmp.ne.s32.totalorder %s127, %s143
      %p145 = scmp.eq.s32.totalorder %s25, 0
      %p146 = por %p144, %p145
      %p147 = scmp.le.s32.totalorder 1, %s19
      %p148 = scmp.lt.s32.totalorder %s19, 3
      %p149 = pnand %p147, %p148
      %p150 = pneg %p149
      // Predicated region
      $region9: #{tpu_custom_call.1} parent=5 // pred_check
        _
      $region10: #{tpu_custom_call.1} parent=5 // pred_check_branch
        %152 = sbr.rel (%p149) target = $region12
      $region11: #{tpu_custom_call.1} parent=5 // pred_region
        %s153 = ssub.s32 %s19, 1
        // Predicated region
        $region13: #{tpu_custom_call.1} parent=11 // pred_check
          %p154 = pneg %p66
        $region14: #{tpu_custom_call.1} parent=11 // pred_check_branch
          %156 = sbr.rel (%p154) target = $region16
        $region15: #{tpu_custom_call.1} parent=11 // pred_region
          %s158 = ssub.s32 2048, 2048
          %159 = vsyncadd [#allocation3], %s158
          %s160 = sshll.u32 [#allocation2], 4
          %s161 = int_to_ptr.vmem [resolvable:$true] %s160
          %166 = dma.hbm_to_vmem [thread:$0]  %s1, 2048, %s161, [#allocation3], 128, 128, 8
        $region16: #{tpu_custom_call.1} parent=11 // pred_fallthru
          _
        // Predicated region
        $region17: #{tpu_custom_call.1} parent=11 // pred_check
          %p167 = pneg %p87
        $region18: #{tpu_custom_call.1} parent=11 // pred_check_branch
          %169 = sbr.rel (%p167) target = $region20
        $region19: #{tpu_custom_call.1} parent=11 // pred_region
          %s171 = ssub.s32 2048, 2048
          %172 = vsyncadd [#allocation6], %s171
          %s173 = sshll.u32 [#allocation5], 4
          %s174 = int_to_ptr.vmem [resolvable:$true] %s173
          %179 = dma.hbm_to_vmem [thread:$0]  %s2, 2048, %s174, [#allocation6], 128, 128, 8
        $region20: #{tpu_custom_call.1} parent=11 // pred_fallthru
          _
      $region12: #{tpu_custom_call.1} parent=5 // pred_fallthru
        _
      %p180 = scmp.lt.s32.totalorder %s19, 2
      // Predicated region
      $region21: #{tpu_custom_call.1} parent=5 // pred_check
        %p181 = pneg %p180
      $region22: #{tpu_custom_call.1} parent=5 // pred_check_branch
        %183 = sbr.rel (%p181) target = $region24
      $region23: #{tpu_custom_call.1} parent=5 // pred_region
        // Predicated region
        $region25: #{tpu_custom_call.1} parent=23 // pred_check
          %p184 = pneg %p39
        $region26: #{tpu_custom_call.1} parent=23 // pred_check_branch
          %186 = sbr.rel (%p184) target = $region28
        $region27: #{tpu_custom_call.1} parent=23 // pred_region
          %s187 = smul.u32 2, %s19
          %p188 = scmp.lt.s32.totalorder %s187, 3
          %s189 = scalar_select %p188, %s187, 3
          %s190 = smul.addr %s189, 8
          %s191 = scalar_lea.vmem %s0, %s190
          %s192 = smul.u32 2, %s19
        $region28: #{tpu_custom_call.1} parent=23 // pred_fallthru
          _
      $region24: #{tpu_custom_call.1} parent=5 // pred_fallthru
        _
      %p193 = scmp.le.s32.totalorder 1, %s19
      %p194 = scmp.lt.s32.totalorder %s19, 3
      %p195 = pnand %p193, %p194
      %p196 = pneg %p195
      // Predicated region
      $region29: #{tpu_custom_call.1} parent=5 // pred_check
        _
      $region30: #{tpu_custom_call.1} parent=5 // pred_check_branch
        %198 = sbr.rel (%p195) target = $region32
      $region31: #{tpu_custom_call.1} parent=5 // pred_region
        %s199 = ssub.s32 %s19, 1
        // Predicated region
        $region33: #{tpu_custom_call.1} parent=31 // pred_check
          %p200 = pneg %p66
        $region34: #{tpu_custom_call.1} parent=31 // pred_check_branch
          %202 = sbr.rel (%p200) target = $region36
        $region35: #{tpu_custom_call.1} parent=31 // pred_region
          %203 = dma.done [#allocation3], 2048
        $region36: #{tpu_custom_call.1} parent=31 // pred_fallthru
          _
        // Predicated region
        $region37: #{tpu_custom_call.1} parent=31 // pred_check
          %p204 = pneg %p87
        $region38: #{tpu_custom_call.1} parent=31 // pred_check_branch
          %206 = sbr.rel (%p204) target = $region40
        $region39: #{tpu_custom_call.1} parent=31 // pred_region
          %207 = dma.done [#allocation6], 2048
        $region40: #{tpu_custom_call.1} parent=31 // pred_fallthru
          _
        %s208 = smul.u32 2, %s24
        %p209 = scmp.lt.s32.totalorder %s208, 3
        %s210 = scalar_select %p209, %s208, 3
        %s211 = smul.addr %s210, 8
        %s212 = scalar_lea.vmem %s0, %s211
        %p213 = pneg %p45
        %p214 = pneg %p42
        %p215 = pneg %p66
        %p216 = pneg %p63
        %p217 = pneg %p87
        %p218 = pneg %p84
        %p219 = pneg %p113
        %p220 = pneg %p110
        %s221 = sand.u32 %s100, 1
        %s222 = scalar_lea.sflag [#allocation4], %s221
        %s223 = sand.u32 %s100, 1
        %s224 = smul.addr %s223, 16
        %s225 = scalar_lea.vmem [#allocation7], %s224
        %p226 = pneg %p139
        %p227 = pneg %p136
        %s228 = sand.u32 %s126, 1
        %s229 = scalar_lea.sflag [#allocation9], %s228
        %s230 = sand.u32 %s126, 1
        %s231 = smul.addr %s230, 16
        %s232 = scalar_lea.vmem [#allocation8], %s231
        %s233 = smul.u32 2, %s24
        %p234 = scmp.lt.s32.totalorder %s233, 3
        %s235 = scalar_select %p234, %s233, 3
        %s236 = smul.addr %s235, 8
        %s237 = scalar_lea.vmem %s0, %s236
        %s238 = smul.u32 2, %s24
        %s239 = smul.u32 2, %s24
        %s240 = smul.u32 2, %s24
        %v241 = vld [vmem:[%s237] sm:$0xff]
        %v242 = vld [vmem:[%s237 + $0x8] sm:$0xff]
        %v243 = vlaneseq
        %v244 = vand.u32 %v243, 127
        %245 = vset.pattern.permute.xlu0 0
        %246 = vperm.xlu0 %245, %v241
        %v247 = vpop.permute.xlu0 %246
        %248 = vset.pattern.permute.xlu0 0
        %249 = vperm.xlu0 %248, %v242
        %v250 = vpop.permute.xlu0 %249
        %vm251 = vcmp.eq.s32.totalorder %v244, %v247
        %vm252 = vcmp.eq.s32.totalorder %v244, %v250
        %253 = vset.pattern.permute.xlu0 1
        %254 = vperm.xlu0 %253, %v241
        %v255 = vpop.permute.xlu0 %254
        %256 = vset.pattern.permute.xlu0 1
        %257 = vperm.xlu0 %256, %v242
        %v258 = vpop.permute.xlu0 %257
        %vm259 = vcmp.eq.s32.totalorder %v244, %v255
        %vm260 = vcmp.eq.s32.totalorder %v244, %v258
        %vm261 = vmor %vm251, %vm259
        %vm262 = vmor %vm252, %vm260
        %263 = vset.pattern.permute.xlu0 2
        %264 = vperm.xlu0 %263, %v241
        %v265 = vpop.permute.xlu0 %264
        %266 = vset.pattern.permute.xlu0 2
        %267 = vperm.xlu0 %266, %v242
        %v268 = vpop.permute.xlu0 %267
        %vm269 = vcmp.eq.s32.totalorder %v244, %v265
        %vm270 = vcmp.eq.s32.totalorder %v244, %v268
        %271 = vset.pattern.permute.xlu0 3
        %272 = vperm.xlu0 %271, %v241
        %v273 = vpop.permute.xlu0 %272
        %274 = vset.pattern.permute.xlu0 3
        %275 = vperm.xlu0 %274, %v242
        %v276 = vpop.permute.xlu0 %275
        %vm277 = vcmp.eq.s32.totalorder %v244, %v273
        %vm278 = vcmp.eq.s32.totalorder %v244, %v276
        %vm279 = vmor %vm269, %vm277
        %vm280 = vmor %vm270, %vm278
        %v281 = vsel %vm261, 1, 0
        %v282 = vsel %vm262, 1, 0
        %v283 = vcvt.s32.f32 %v281
        %v284 = vcvt.s32.f32 %v282
        %v285 = vld [vmem:[#allocation2] sm:$0xff]
        %v286 = vld [vmem:[#allocation2 + $0x8] sm:$0xff]
        %v287 = vld [vmem:[#allocation2 + $0x10] sm:$0xff]
        %v288 = vld [vmem:[#allocation2 + $0x18] sm:$0xff]
        %v289 = vld [vmem:[#allocation2 + $0x20] sm:$0xff]
        %v290 = vld [vmem:[#allocation2 + $0x28] sm:$0xff]
        %v291 = vld [vmem:[#allocation2 + $0x30] sm:$0xff]
        %v292 = vld [vmem:[#allocation2 + $0x38] sm:$0xff]
        %v293 = vld [vmem:[#allocation2 + $0x40] sm:$0xff]
        %v294 = vld [vmem:[#allocation2 + $0x48] sm:$0xff]
        %v295 = vld [vmem:[#allocation2 + $0x50] sm:$0xff]
        %v296 = vld [vmem:[#allocation2 + $0x58] sm:$0xff]
        %v297 = vld [vmem:[#allocation2 + $0x60] sm:$0xff]
        %v298 = vld [vmem:[#allocation2 + $0x68] sm:$0xff]
        %v299 = vld [vmem:[#allocation2 + $0x70] sm:$0xff]
        %v300 = vld [vmem:[#allocation2 + $0x78] sm:$0xff]
        %301 = vmatprep.subr.mxu0 0.0
        %302 = vmatpush1.msra.mxu0 %v300
        %303 = vmatprep.subr.mxu0 0.0
        %304 = vmatpush1.msra.mxu0 %v299
        %305 = vmatprep.subr.mxu0 0.0
        %306 = vmatpush1.msra.mxu0 %v298
        %307 = vmatprep.subr.mxu0 0.0
        %308 = vmatpush1.msra.mxu0 %v297
        %309 = vmatprep.subr.mxu0 0.0
        %310 = vmatpush1.msra.mxu0 %v296
        %311 = vmatprep.subr.mxu0 0.0
        %312 = vmatpush1.msra.mxu0 %v295
        %313 = vmatprep.subr.mxu0 0.0
        %314 = vmatpush1.msra.mxu0 %v294
        %315 = vmatprep.subr.mxu0 0.0
        %316 = vmatpush1.msra.mxu0 %v293
        %317 = vmatprep.subr.mxu0 0.0
        %318 = vmatpush1.msra.mxu0 %v292
        %319 = vmatprep.subr.mxu0 0.0
        %320 = vmatpush1.msra.mxu0 %v291
        %321 = vmatprep.subr.mxu0 0.0
        %322 = vmatpush1.msra.mxu0 %v290
        %323 = vmatprep.subr.mxu0 0.0
        %324 = vmatpush1.msra.mxu0 %v289
        %325 = vmatprep.subr.mxu0 0.0
        %326 = vmatpush1.msra.mxu0 %v288
        %327 = vmatprep.subr.mxu0 0.0
        %328 = vmatpush1.msra.mxu0 %v287
        %329 = vmatprep.subr.mxu0 0.0
        %330 = vmatpush1.msra.mxu0 %v286
        %331 = vmatprep.subr.mxu0 0.0
        %332 = vmatpush1.msra.mxu0 %v285
        %333 = vmatprep.subr.mxu0 0.0
        %334 = vmatpush2.msra.mxu0 0.0
        %335 = vmatprep.subr.mxu0 0.0
        %336 = vmatpush2.msra.mxu0 0.0
        %337 = vmatprep.subr.mxu0 0.0
        %338 = vmatpush2.msra.mxu0 0.0
        %339 = vmatprep.subr.mxu0 0.0
        %340 = vmatpush2.msra.mxu0 0.0
        %341 = vmatprep.subr.mxu0 0.0
        %342 = vmatpush2.msra.mxu0 0.0
        %343 = vmatprep.subr.mxu0 0.0
        %344 = vmatpush2.msra.mxu0 0.0
        %345 = vmatprep.subr.mxu0 0.0
        %346 = vmatpush2.msra.mxu0 0.0
        %347 = vmatprep.subr.mxu0 0.0
        %348 = vmatpush2.msra.mxu0 0.0
        %349 = vmatprep.subr.mxu0 0.0
        %350 = vmatpush2.msra.mxu0 0.0
        %351 = vmatprep.subr.mxu0 0.0
        %352 = vmatpush2.msra.mxu0 0.0
        %353 = vmatprep.subr.mxu0 0.0
        %354 = vmatpush2.msra.mxu0 0.0
        %355 = vmatprep.subr.mxu0 0.0
        %356 = vmatpush2.msra.mxu0 0.0
        %357 = vmatprep.subr.mxu0 0.0
        %358 = vmatpush2.msra.mxu0 0.0
        %359 = vmatprep.subr.mxu0 0.0
        %360 = vmatpush2.msra.mxu0 0.0
        %361 = vmatprep.subr.mxu0 0.0
        %362 = vmatpush2.msra.mxu0 0.0
        %363 = vmatprep.subr.mxu0 0.0
        %364 = vmatpush2.msra.mxu0 0.0
        %365 = vmatprep.mubr.f32.mxu0 0.0
        %366 = vmatmul.mubr.f32.gmra.mxu0 %v283
        %v367 = vpop.f32.mrf.mxu0
        %v368 = vadd.f32 0.0, %v367
        %v369 = vpop.f32.mrf.mxu0
        %370 = vmatprep.mubr.f32.mxu0 0.0
        %371 = vmatmul.mubr.f32.gmra.mxu0 %v284
        %v372 = vpop.f32.mrf.mxu0
        %v373 = vadd.f32 0.0, %v372
        %v374 = vpop.f32.mrf.mxu0
        %375 = vdwg.mxu0
        %376 = vst [vmem:[%s225] sm:$0xff] %v368
        %377 = vst [vmem:[%s225 + $0x8] sm:$0xff] %v373
        %v378 = vsel %vm279, 1, 0
        %v379 = vsel %vm280, 1, 0
        %v380 = vcvt.s32.f32 %v378
        %v381 = vcvt.s32.f32 %v379
        %v382 = vld [vmem:[#allocation5] sm:$0xff]
        %v383 = vld [vmem:[#allocation5 + $0x8] sm:$0xff]
        %v384 = vld [vmem:[#allocation5 + $0x10] sm:$0xff]
        %v385 = vld [vmem:[#allocation5 + $0x18] sm:$0xff]
        %v386 = vld [vmem:[#allocation5 + $0x20] sm:$0xff]
        %v387 = vld [vmem:[#allocation5 + $0x28] sm:$0xff]
        %v388 = vld [vmem:[#allocation5 + $0x30] sm:$0xff]
        %v389 = vld [vmem:[#allocation5 + $0x38] sm:$0xff]
        %v390 = vld [vmem:[#allocation5 + $0x40] sm:$0xff]
        %v391 = vld [vmem:[#allocation5 + $0x48] sm:$0xff]
        %v392 = vld [vmem:[#allocation5 + $0x50] sm:$0xff]
        %v393 = vld [vmem:[#allocation5 + $0x58] sm:$0xff]
        %v394 = vld [vmem:[#allocation5 + $0x60] sm:$0xff]
        %v395 = vld [vmem:[#allocation5 + $0x68] sm:$0xff]
        %v396 = vld [vmem:[#allocation5 + $0x70] sm:$0xff]
        %v397 = vld [vmem:[#allocation5 + $0x78] sm:$0xff]
        %398 = vmatprep.subr.mxu0 0.0
        %399 = vmatpush1.msra.mxu0 %v397
        %400 = vmatprep.subr.mxu0 0.0
        %401 = vmatpush1.msra.mxu0 %v396
        %402 = vmatprep.subr.mxu0 0.0
        %403 = vmatpush1.msra.mxu0 %v395
        %404 = vmatprep.subr.mxu0 0.0
        %405 = vmatpush1.msra.mxu0 %v394
        %406 = vmatprep.subr.mxu0 0.0
        %407 = vmatpush1.msra.mxu0 %v393
        %408 = vmatprep.subr.mxu0 0.0
        %409 = vmatpush1.msra.mxu0 %v392
        %410 = vmatprep.subr.mxu0 0.0
        %411 = vmatpush1.msra.mxu0 %v391
        %412 = vmatprep.subr.mxu0 0.0
        %413 = vmatpush1.msra.mxu0 %v390
        %414 = vmatprep.subr.mxu0 0.0
        %415 = vmatpush1.msra.mxu0 %v389
        %416 = vmatprep.subr.mxu0 0.0
        %417 = vmatpush1.msra.mxu0 %v388
        %418 = vmatprep.subr.mxu0 0.0
        %419 = vmatpush1.msra.mxu0 %v387
        %420 = vmatprep.subr.mxu0 0.0
        %421 = vmatpush1.msra.mxu0 %v386
        %422 = vmatprep.subr.mxu0 0.0
        %423 = vmatpush1.msra.mxu0 %v385
        %424 = vmatprep.subr.mxu0 0.0
        %425 = vmatpush1.msra.mxu0 %v384
        %426 = vmatprep.subr.mxu0 0.0
        %427 = vmatpush1.msra.mxu0 %v383
        %428 = vmatprep.subr.mxu0 0.0
        %429 = vmatpush1.msra.mxu0 %v382
        %430 = vmatprep.subr.mxu0 0.0
        %431 = vmatpush2.msra.mxu0 0.0
        %432 = vmatprep.subr.mxu0 0.0
        %433 = vmatpush2.msra.mxu0 0.0
        %434 = vmatprep.subr.mxu0 0.0
        %435 = vmatpush2.msra.mxu0 0.0
        %436 = vmatprep.subr.mxu0 0.0
        %437 = vmatpush2.msra.mxu0 0.0
        %438 = vmatprep.subr.mxu0 0.0
        %439 = vmatpush2.msra.mxu0 0.0
        %440 = vmatprep.subr.mxu0 0.0
        %441 = vmatpush2.msra.mxu0 0.0
        %442 = vmatprep.subr.mxu0 0.0
        %443 = vmatpush2.msra.mxu0 0.0
        %444 = vmatprep.subr.mxu0 0.0
        %445 = vmatpush2.msra.mxu0 0.0
        %446 = vmatprep.subr.mxu0 0.0
        %447 = vmatpush2.msra.mxu0 0.0
        %448 = vmatprep.subr.mxu0 0.0
        %449 = vmatpush2.msra.mxu0 0.0
        %450 = vmatprep.subr.mxu0 0.0
        %451 = vmatpush2.msra.mxu0 0.0
        %452 = vmatprep.subr.mxu0 0.0
        %453 = vmatpush2.msra.mxu0 0.0
        %454 = vmatprep.subr.mxu0 0.0
        %455 = vmatpush2.msra.mxu0 0.0
        %456 = vmatprep.subr.mxu0 0.0
        %457 = vmatpush2.msra.mxu0 0.0
        %458 = vmatprep.subr.mxu0 0.0
        %459 = vmatpush2.msra.mxu0 0.0
        %460 = vmatprep.subr.mxu0 0.0
        %461 = vmatpush2.msra.mxu0 0.0
        %462 = vmatprep.mubr.f32.mxu0 0.0
        %463 = vmatmul.mubr.f32.gmra.mxu0 %v380
        %v464 = vpop.f32.mrf.mxu0
        %v465 = vadd.f32 0.0, %v464
        %v466 = vpop.f32.mrf.mxu0
        %467 = vmatprep.mubr.f32.mxu0 0.0
        %468 = vmatmul.mubr.f32.gmra.mxu0 %v381
        %v469 = vpop.f32.mrf.mxu0
        %v470 = vadd.f32 0.0, %v469
        %v471 = vpop.f32.mrf.mxu0
        %472 = vdwg.mxu0
        %473 = vst [vmem:[%s232] sm:$0xff] %v465
        %474 = vst [vmem:[%s232 + $0x8] sm:$0xff] %v470
        %s475 = sand.u32 %s100, 1
        %s476 = scalar_lea.sflag [#allocation4], %s475
        %s477 = sand.u32 %s100, 1
        %s478 = smul.addr %s477, 16
        %s479 = scalar_lea.vmem [#allocation7], %s478
        %s480 = sand.u32 %s126, 1
        %s481 = scalar_lea.sflag [#allocation9], %s480
        %s482 = sand.u32 %s126, 1
        %s483 = smul.addr %s482, 16
        %s484 = scalar_lea.vmem [#allocation8], %s483
        // Predicated region
        $region41: #{tpu_custom_call.1} parent=31 // pred_check
          %p485 = pneg %p110
        $region42: #{tpu_custom_call.1} parent=31 // pred_check_branch
          %487 = sbr.rel (%p485) target = $region44
        $region43: #{tpu_custom_call.1} parent=31 // pred_region
          %s488 = smul.u32 2, %s24
          %s490 = ssub.s32 256, 256
          %491 = vsyncadd %s476, %s490
          %s492 = smul.addr %s488, 128
          %s493 = scalar_lea.hbm %s3, %s492
          %s494 = sshll.u32 %s479, 4
          %s495 = int_to_ptr.vmem [resolvable:$true] %s494
          %500 = dma.vmem_to_hbm [thread:$0]  %s495, 256, %s493, %s476, 128, 128, 8
        $region44: #{tpu_custom_call.1} parent=31 // pred_fallthru
          _
        // Predicated region
        $region45: #{tpu_custom_call.1} parent=31 // pred_check
          %p501 = pneg %p136
        $region46: #{tpu_custom_call.1} parent=31 // pred_check_branch
          %503 = sbr.rel (%p501) target = $region48
        $region47: #{tpu_custom_call.1} parent=31 // pred_region
          %s504 = smul.u32 2, %s24
          %s506 = ssub.s32 256, 256
          %507 = vsyncadd %s481, %s506
          %s508 = smul.addr %s504, 128
          %s509 = scalar_lea.hbm %s4, %s508
          %s510 = sshll.u32 %s484, 4
          %s511 = int_to_ptr.vmem [resolvable:$true] %s510
          %516 = dma.vmem_to_hbm [thread:$0]  %s511, 256, %s509, %s481, 128, 128, 8
        $region48: #{tpu_custom_call.1} parent=31 // pred_fallthru
          _
      $region32: #{tpu_custom_call.1} parent=5 // pred_fallthru
        _
      %p517 = scmp.le.s32.totalorder 2, %s19
      // Predicated region
      $region49: #{tpu_custom_call.1} parent=5 // pred_check
        %p518 = pneg %p517
      $region50: #{tpu_custom_call.1} parent=5 // pred_check_branch
        %520 = sbr.rel (%p518) target = $region52
      $region51: #{tpu_custom_call.1} parent=5 // pred_region
        %s521 = ssub.s32 %s19, 2
        // Predicated region
        $region53: #{tpu_custom_call.1} parent=51 // pred_check
          %p522 = pneg %p116
        $region54: #{tpu_custom_call.1} parent=51 // pred_check_branch
          %524 = sbr.rel (%p522) target = $region56
        $region55: #{tpu_custom_call.1} parent=51 // pred_region
          %s525 = sand.u32 %s101, 1
          %s526 = scalar_lea.sflag [#allocation4], %s525
          %s527 = sand.u32 %s101, 1
          %s528 = smul.addr %s527, 16
          %s529 = scalar_lea.vmem [#allocation7], %s528
          %530 = dma.done %s526, 256
        $region56: #{tpu_custom_call.1} parent=51 // pred_fallthru
          _
        // Predicated region
        $region57: #{tpu_custom_call.1} parent=51 // pred_check
          %p531 = pneg %p142
        $region58: #{tpu_custom_call.1} parent=51 // pred_check_branch
          %533 = sbr.rel (%p531) target = $region60
        $region59: #{tpu_custom_call.1} parent=51 // pred_region
          %s534 = sand.u32 %s127, 1
          %s535 = scalar_lea.sflag [#allocation9], %s534
          %s536 = sand.u32 %s127, 1
          %s537 = smul.addr %s536, 16
          %s538 = scalar_lea.vmem [#allocation8], %s537
          %539 = dma.done %s535, 256
        $region60: #{tpu_custom_call.1} parent=51 // pred_fallthru
          _
      $region52: #{tpu_custom_call.1} parent=5 // pred_fallthru
        _
    $region6: #{tpu_custom_call.1} parent=1 // loop_footer
      %s23 = sadd.s32 1, %s19
    $region7: #{tpu_custom_call.1} parent=1 // loop_footer_branch
      %18 = sbr.rel target = $region3
    $region8: #{tpu_custom_call.1} parent=1 // loop_exit
      _
    %540 = vsyncpa [#allocation3], 1
    %s541 = scalar_lea.sflag [#allocation3], 1
    %542 = vsyncpa %s541, 1
    %543 = vsyncpa [#allocation6], 1
    %544 = vsyncpa [#allocation4], 1
    %s545 = scalar_lea.sflag [#allocation4], 1
    %546 = vsyncpa %s545, 1
    %547 = vsyncpa [#allocation9], 1
    %s548 = scalar_lea.sflag [#allocation9], 1
    %549 = vsyncpa %s548, 1

</llo_original>
